<compile_context>
chip_gen: v7x
topology: tpu7x:2x2x1
jax: 0.10.0
libtpu: 0.0.40
codegen_flags: <defaults>
</compile_context>

<pallas_src>
import functools

import jax
import jax.numpy as jnp
from jax import lax
from jax.experimental import pallas as pl
from jax.experimental.pallas import tpu as pltpu


# ----------------------------------------------------------------------------
# Device-aware tile selection
# ----------------------------------------------------------------------------
def _tpu_vmem_bytes():
    try:
        return int(pltpu.get_tpu_info().vmem_capacity_bytes)
    except Exception:
        return 64 * 1024 * 1024          # conservative fallback (v7x per-TC)


def _choose_tiles(n, h, v):
    """Pick (token_tile, vocab_tile, vmem_limit_bytes) from the device VMEM.

    token_tile sets the reuse factor of the streamed [V, H] weight (compute
    roofline needs TN >= ~240 on v5e, ~600+ on v6e / per-TC v7x), so we target
    512-1024.  vocab_tile only keeps the MXU N-dim fat; the weight is streamed
    regardless, so TV is shrunk first when VMEM is tight (v7x: 64 MiB).
    """
    vmem = _tpu_vmem_bytes()
    budget = vmem // 2                     # buffer budget; headroom for Mosaic
    tn_target = 1024 if vmem >= (96 << 20) else 512

    n8 = ((n + 7) // 8) * 8                # sublane-aligned token count
    tn = min(tn_target, n8)

    def usage(tn_, tv_):
        x_blk = 2 * tn_ * h * 2            # bf16 activations, double-buffered
        w_blk = 2 * tv_ * h * 2            # bf16 weights, double-buffered
        lab_blk = 2 * tn_ * 128 * 4        # int32 labels (lane padded)
        tmp = 3 * tn_ * tv_ * 4            # f32 logits / exp temporaries
        scratch = 3 * tn_ * 128 * 4        # m / s / ll running stats
        outs = 2 * 2 * 128 * 4
        return x_blk + w_blk + lab_blk + tmp + scratch + outs

    tv = None
    for cand in (4096, 2048, 1024, 512, 256, 128):
        if cand <= v and v % cand == 0 and usage(tn, cand) <= budget:
            tv = cand
            break
    if tv is None:
        # small or oddly-sized vocab: take the whole vocab as one tile and, if
        # needed, shrink the token tile until the buffers fit.
        tv = v
        while tn > 8 and usage(tn, tv) > budget:
            tn //= 2
        tn = max(tn, 8)

    vmem_limit = int(min(0.8 * vmem, max(1.5 * usage(tn, tv), 16 << 20)))
    return tn, tv, vmem_limit


# ----------------------------------------------------------------------------
# Pallas kernel: fused lm-head matmul + online-softmax cross-entropy
# ----------------------------------------------------------------------------
def _fused_lce_kernel(x_ref, w_ref, lab_ref, lsum_ref, cnt_ref,
                      m_sc, s_sc, ll_sc, *, pad_id, vocab_tile):
    j = pl.program_id(1)                   # vocab tile index (inner, arbitrary)
    nvt = pl.num_programs(1)

    @pl.when(j == 0)
    def _init():
        m_sc[...] = jnp.full_like(m_sc, -jnp.inf)
        s_sc[...] = jnp.zeros_like(s_sc)
        ll_sc[...] = jnp.zeros_like(ll_sc)

    # (TN, H) bf16 x (TV, H) bf16 -> (TN, TV) f32 on the MXU.  Contracting
    # dim 1 of both operands (A . B^T) is the native Mosaic trans_b path:
    # the [V, H] weight block is consumed directly, no per-tile transpose.
    logits = lax.dot_general(
        x_ref[...], w_ref[...],
        dimension_numbers=(((1,), (1,)), ((), ())),
        preferred_element_type=jnp.float32)

    lab = lab_ref[...]                     # (TN, 1) int32, global vocab ids
    tn, tv = logits.shape

    # ---- online log-sum-exp across vocab tiles ----
    m_prev = m_sc[...]
    m_new = jnp.maximum(m_prev, jnp.max(logits, axis=-1, keepdims=True))
    alpha = jnp.exp(m_prev - m_new)
    p = jnp.exp(logits - m_new)
    s_sc[...] = alpha * s_sc[...] + jnp.sum(p, axis=-1, keepdims=True)
    m_sc[...] = m_new

    # ---- label logit: only the vocab tile owning the label contributes ----
    # (1, TV) iota broadcast against (TN, 1) labels; one-hot mask-multiply.
    local_lab = lab - j * vocab_tile
    lane_ids = lax.broadcasted_iota(jnp.int32, (1, tv), 1)
    hit = (lane_ids == local_lab).astype(jnp.float32)        # (TN, TV)
    ll_sc[...] += jnp.sum(logits * hit, axis=-1, keepdims=True)

    # ---- finalize: per-token-tile partial loss / count (deferred reduce) ----
    @pl.when(j == nvt - 1)
    def _finalize():
        lse = m_sc[...] + jnp.log(s_sc[...])                  # (TN, 1)
        nll = lse - ll_sc[...]                                # (TN, 1)
        valid = lab != pad_id                                 # ignore_index mask
        lsum = jnp.sum(jnp.where(valid, nll, 0.0))
        cnt = jnp.sum(valid.astype(jnp.float32))
        lsum_ref[...] = jnp.broadcast_to(lsum, lsum_ref.shape).astype(jnp.float32)
        cnt_ref[...] = jnp.broadcast_to(cnt, cnt_ref.shape).astype(jnp.float32)


def fused_linear_cross_entropy(hidden, lm_head_weight_bf16, shifted_labels,
                               pad_id, token_tile=None, vocab_tile=None):
    """hidden: [N, H] (bf16); lm_head_weight_bf16: [V, H]; shifted_labels: [N].

    Mean NLL over tokens whose label != pad_id — identical semantics to
    CrossEntropyLoss(reduction='mean', ignore_index=pad_id) on
    logits = hidden @ W^T, without materializing [N, V] logits.
    """
    n, h = hidden.shape
    v, h_w = lm_head_weight_bf16.shape
    assert h == h_w

    auto_tn, auto_tv, vmem_limit = _choose_tiles(n, h, v)
    tn = token_tile if token_tile is not None else auto_tn
    tv = vocab_tile if vocab_tile is not None else auto_tv
    assert v % tv == 0, "vocab_size must be divisible by the vocab tile"

    n_pad = int(pl.cdiv(n, tn)) * tn
    if n_pad != n:
        # TODO(synk): mask the ragged last token tile in-kernel instead of this
        # host pad (only hit when B*S is not a multiple of token_tile).
        hidden = jnp.pad(hidden, ((0, n_pad - n), (0, 0)))
        shifted_labels = jnp.pad(shifted_labels, (0, n_pad - n),
                                 constant_values=pad_id)

    x = hidden.astype(jnp.bfloat16)        # no-op when hidden is already bf16
    labels2d = shifted_labels.reshape(n_pad, 1).astype(jnp.int32)

    n_tiles = n_pad // tn
    nvt = v // tv

    cost = pl.CostEstimate(
        flops=2 * n_pad * h * v,
        transcendentals=n_pad * v,
        bytes_accessed=(n_pad * h * 2 + n_tiles * v * h * 2
                        + n_pad * 4 + 2 * n_tiles * 128 * 4))

    # TODO(synk): add an H (contraction) split via a third grid axis /
    # pltpu.emit_pipeline when TV*H*2B per weight buffer exceeds ~8-12 MiB
    # (e.g. H >= 8192 on v7x's 64 MiB VMEM).
    kernel = functools.partial(_fused_lce_kernel, pad_id=pad_id, vocab_tile=tv)
    lsum, cnt = pl.pallas_call(
        kernel,
        out_shape=(
            jax.ShapeDtypeStruct((n_tiles, 1, 128), jnp.float32),
            jax.ShapeDtypeStruct((n_tiles, 1, 128), jnp.float32),
        ),
        grid_spec=pltpu.PrefetchScalarGridSpec(
            num_scalar_prefetch=0,
            grid=(n_tiles, nvt),                 # vocab (reduction) axis last
            in_specs=[
                pl.BlockSpec((tn, h), lambda i, j: (i, 0)),   # activations
                pl.BlockSpec((tv, h), lambda i, j: (j, 0)),   # weight [V, H]
                pl.BlockSpec((tn, 1), lambda i, j: (i, 0)),   # shifted labels
            ],
            out_specs=[
                pl.BlockSpec((1, 1, 128), lambda i, j: (i, 0, 0)),
                pl.BlockSpec((1, 1, 128), lambda i, j: (i, 0, 0)),
            ],
            scratch_shapes=[
                pltpu.VMEM((tn, 1), jnp.float32),   # running max
                pltpu.VMEM((tn, 1), jnp.float32),   # running sum-exp
                pltpu.VMEM((tn, 1), jnp.float32),   # running label logit
            ]),
        compiler_params=pltpu.CompilerParams(
            dimension_semantics=("parallel", "arbitrary"),
            vmem_limit_bytes=vmem_limit),
        cost_estimate=cost,
    )(x, lm_head_weight_bf16, labels2d)

    loss = jnp.sum(lsum[:, 0, 0]) / jnp.maximum(jnp.sum(cnt[:, 0, 0]), 1.0)
    return loss


# ----------------------------------------------------------------------------
# BaseModel equivalent (JAX / Pallas)
# ----------------------------------------------------------------------------
class PallasBaseModel:
    def __init__(self, *, vocab_size, hidden_size, max_len, pad_id,
                 fuse_linear_loss=True, token_tile=None, vocab_tile=None,
                 key=None):
        self.vocab_size = vocab_size
        self.hidden_size = hidden_size
        self.max_len = max_len
        self.pad_id = pad_id
        self.fuse_linear_loss = fuse_linear_loss
        self.token_tile = token_tile
        self.vocab_tile = vocab_tile

        key = jax.random.PRNGKey(0) if key is None else key
        k_emb, k_head = jax.random.split(key)

        # MXU-aligned hidden dim: zero-pad H once at parameter setup (zero
        # columns in both the embedding and the lm head leave logits unchanged).
        self.h_pad = int(pl.cdiv(hidden_size, 128)) * 128

        emb = 0.02 * jax.random.normal(k_emb, (vocab_size, hidden_size),
                                       jnp.float32)
        head = 0.02 * jax.random.normal(k_head, (vocab_size, hidden_size),
                                        jnp.float32)   # [V, H] PyTorch conv.
        pad_w = ((0, 0), (0, self.h_pad - hidden_size))
        # bf16 embedding table -> hidden_states come out bf16 (no per-step cast)
        self.embed_table = jnp.pad(emb, pad_w).astype(jnp.bfloat16)
        self.lm_head_weight = jnp.pad(head, pad_w)                 # f32 master
        self.lm_head_weight_bf16 = self.lm_head_weight.astype(jnp.bfloat16)

        # rotary freqs (self.freqs_cis); stored as cos/sin instead of complex
        half = hidden_size // 2
        inv_freq = 1.0 / (10000.0 ** (jnp.arange(0, half, dtype=jnp.float32) / half))
        t = jnp.arange(max_len, dtype=jnp.float32)
        angles = jnp.outer(t, inv_freq)                            # [max_len, H/2]
        self.freqs_cis = jnp.stack([jnp.cos(angles), jnp.sin(angles)], axis=-1)

    # --- cut_sequence: sequence-parallel world size == 1, atten_type == None
    def cut_sequence(self, input_ids, labels=None):
        return input_ids, labels, self.freqs_cis

    # --- embedding: abstract in the original; table lookup stand-in
    # TODO(synk): BaseModel.embedding is abstract (NotImplementedError); using a
    # plain embedding-table lookup + pad mask as a deterministic stand-in.
    def embedding(self, input_ids):
        hidden_states = jnp.take(self.embed_table, input_ids, axis=0)   # [B,S,Hp] bf16
        attention_mask = (input_ids != self.pad_id).astype(jnp.float32)  # [B, S]
        return hidden_states, attention_mask

    # --- compute_loss semantics (shift + CE with ignore_index, mean)
    def compute_loss(self, hidden_states, labels):
        b, s, h = hidden_states.shape
        # shift_labels = labels[..., 1:]; the logit at the last position of each
        # sequence is dropped by assigning pad_id (ignore_index) there ->
        # identical mean-CE to logits[..., :-1, :] vs labels[..., 1:].
        shifted = jnp.concatenate(
            [labels[:, 1:], jnp.full((b, 1), self.pad_id, dtype=labels.dtype)],
            axis=1)
        return fused_linear_cross_entropy(
            hidden_states.reshape(b * s, h),
            self.lm_head_weight_bf16,
            shifted.reshape(b * s),
            self.pad_id,
            token_tile=self.token_tile,
            vocab_tile=self.vocab_tile)

    # --- model_forward: abstract in the original; lm-head + fused CE stand-in
    # TODO(synk): BaseModel.model_forward is abstract; the transformer trunk is
    # not specified, so hidden_states go straight through the fused lm-head+CE
    # kernel.  Full [B, S, V] logits are intentionally not materialized.
    def model_forward(self, hidden_states, labels, freqs_cis, attention_mask):
        loss = self.compute_loss(hidden_states, labels)
        return loss, None

    # --- compute_metric: gather at (pos-1), argmax over vocab, compare to label
    # Only the B rows of logits the metric needs are computed (tiny glue
    # matmul) — values identical to gathering full logits at pos-1.
    def compute_metric(self, hidden_states, labels, cal_metric_pos_tensor):
        if cal_metric_pos_tensor is None:
            return {}
        pos = cal_metric_pos_tensor.astype(jnp.int32)                    # [B]
        batch_idx = jnp.arange(hidden_states.shape[0])
        h_rows = hidden_states[batch_idx, pos - 1, :]                    # [B, Hp]
        target_logits = jnp.einsum(
            'bh,vh->bv', h_rows, self.lm_head_weight_bf16,
            preferred_element_type=jnp.float32)                          # [B, V]
        preds = jnp.argmax(target_logits, axis=-1)                       # [B]
        target_labels = labels[batch_idx, pos]                           # [B]
        # TODO(synk): original calls external cal_metric(); accuracy stand-in.
        acc = jnp.mean((preds == target_labels).astype(jnp.float32))
        return {"accuracy": acc}

    def forward(self, *, input_ids, labels, cal_metric_pos_tensor=None):
        input_ids, labels, freqs_cis = self.cut_sequence(input_ids, labels)
        hidden_states, attention_mask = self.embedding(input_ids)
        loss, _ = self.model_forward(hidden_states, labels, freqs_cis,
                                     attention_mask)
        if cal_metric_pos_tensor is not None:
            metrics = self.compute_metric(hidden_states, labels,
                                          cal_metric_pos_tensor)
        else:
            metrics = {}
        return loss, metrics


# ----------------------------------------------------------------------------
# main
# ----------------------------------------------------------------------------
if __name__ == "__main__":
    B, S, H, V = 2, 8, 32, 128
    PAD_ID = 0

    model = PallasBaseModel(vocab_size=V, hidden_size=H, max_len=S,
                            pad_id=PAD_ID, fuse_linear_loss=True,
                            key=jax.random.PRNGKey(0))

    key = jax.random.PRNGKey(0)
    k_ids, k_lab = jax.random.split(key)
    input_ids = jax.random.randint(k_ids, (B, S), 1, V, dtype=jnp.int32)
    labels = jax.random.randint(k_lab, (B, S), 1, V, dtype=jnp.int32)
    labels = labels.at[1, -1].set(PAD_ID)                 # exercise ignore_index
    cal_metric_pos_tensor = jnp.array([S - 1, S - 2], dtype=jnp.int32)

    loss, metrics = model.forward(input_ids=input_ids, labels=labels,
                                  cal_metric_pos_tensor=cal_metric_pos_tensor)
    jax.block_until_ready(loss)
    jax.block_until_ready(metrics["accuracy"])
    print("KERNEL_OK")
</pallas_src>

<mosaic_0001>
module attributes {stable_mosaic.version = 11 : i64} {
  func.func @_fused_lce_kernel(%arg0: i32, %arg1: i32, %arg2: memref<16x128xbf16, #tpu.memory_space<vmem>>, %arg3: memref<128x128xbf16, #tpu.memory_space<vmem>>, %arg4: memref<16x1xi32, #tpu.memory_space<vmem>>, %arg5: memref<1x1x128xf32, #tpu.memory_space<vmem>>, %arg6: memref<1x1x128xf32, #tpu.memory_space<vmem>>, %arg7: memref<16x1xf32, #tpu.memory_space<vmem>>, %arg8: memref<16x1xf32, #tpu.memory_space<vmem>>, %arg9: memref<16x1xf32, #tpu.memory_space<vmem>>) attributes {dimension_semantics = [#tpu.dimension_semantics<parallel>, #tpu.dimension_semantics<arbitrary>], iteration_bounds = array<i64: 1, 1>, scalar_prefetch = 0 : i64, scratch_operands = 3 : i64, tpu.core_type = #tpu.core_type<tc>, window_params = [{transform_indices = @transform_0, window_bounds = array<i64: 16, 128>}, {transform_indices = @transform_1, window_bounds = array<i64: 128, 128>}, {transform_indices = @transform_2, window_bounds = array<i64: 16, 1>}, {transform_indices = @transform_3, window_bounds = array<i64: 1, 1, 128>}, {transform_indices = @transform_4, window_bounds = array<i64: 1, 1, 128>}]} {
    %c0_i32 = arith.constant 0 : i32
    %0 = arith.cmpi eq, %arg1, %c0_i32 : i32
    %1 = arith.extui %0 : i1 to i32
    %c0_i32_0 = arith.constant 0 : i32
    %2 = arith.cmpi ne, %1, %c0_i32_0 : i32
    scf.if %2 {
      %cst_23 = arith.constant 0xFF800000 : f32
      %41 = vector.broadcast %cst_23 : f32 to vector<16x1xf32>
      %c0_24 = arith.constant 0 : index
      %c0_25 = arith.constant 0 : index
      %42 = vector.load %arg7[%c0_24, %c0_25] : memref<16x1xf32, #tpu.memory_space<vmem>>, vector<16x1xf32>
      tpu.vector_store %arg7[%c0_24, %c0_25], %41 {strides = array<i32>} : memref<16x1xf32, #tpu.memory_space<vmem>>, vector<16x1xf32>,
      %cst_26 = arith.constant 0.000000e+00 : f32
      %43 = vector.broadcast %cst_26 : f32 to vector<16x1xf32>
      %c0_27 = arith.constant 0 : index
      %c0_28 = arith.constant 0 : index
      %44 = vector.load %arg8[%c0_27, %c0_28] : memref<16x1xf32, #tpu.memory_space<vmem>>, vector<16x1xf32>
      tpu.vector_store %arg8[%c0_27, %c0_28], %43 {strides = array<i32>} : memref<16x1xf32, #tpu.memory_space<vmem>>, vector<16x1xf32>,
      %cst_29 = arith.constant 0.000000e+00 : f32
      %45 = vector.broadcast %cst_29 : f32 to vector<16x1xf32>
      %c0_30 = arith.constant 0 : index
      %c0_31 = arith.constant 0 : index
      %46 = vector.load %arg9[%c0_30, %c0_31] : memref<16x1xf32, #tpu.memory_space<vmem>>, vector<16x1xf32>
      tpu.vector_store %arg9[%c0_30, %c0_31], %45 {strides = array<i32>} : memref<16x1xf32, #tpu.memory_space<vmem>>, vector<16x1xf32>,
    } else {
    }
    %c0 = arith.constant 0 : index
    %c0_1 = arith.constant 0 : index
    %3 = vector.load %arg2[%c0, %c0_1] : memref<16x128xbf16, #tpu.memory_space<vmem>>, vector<16x128xbf16>
    %c0_2 = arith.constant 0 : index
    %c0_3 = arith.constant 0 : index
    %4 = vector.load %arg3[%c0_2, %c0_3] : memref<128x128xbf16, #tpu.memory_space<vmem>>, vector<128x128xbf16>
    %cst = arith.constant dense<0.000000e+00> : vector<16x128xf32>
    %5 = tpu.matmul %3, %4, %cst {dimension_numbers = #tpu.dot_dimension_numbers<[1], [1], [0], [0], [0, 0, 1, 0], [], []>} : vector<16x128xbf16>, vector<128x128xbf16>, vector<16x128xf32> -> vector<16x128xf32>
    %c0_4 = arith.constant 0 : index
    %c0_5 = arith.constant 0 : index
    %6 = vector.load %arg4[%c0_4, %c0_5] : memref<16x1xi32, #tpu.memory_space<vmem>>, vector<16x1xi32>
    %c0_6 = arith.constant 0 : index
    %c0_7 = arith.constant 0 : index
    %7 = vector.load %arg7[%c0_6, %c0_7] : memref<16x1xf32, #tpu.memory_space<vmem>>, vector<16x1xf32>
    %cst_8 = arith.constant dense<0xFF800000> : vector<16xf32>
    %8 = vector.multi_reduction <maximumf>, %5, %cst_8 [1] : vector<16x128xf32> to vector<16xf32>
    %9 = vector.shape_cast %8 : vector<16xf32> to vector<16x1xf32>
    %10 = arith.maximumf %7, %9 : vector<16x1xf32>
    %11 = arith.subf %7, %10 : vector<16x1xf32>
    %12 = math.exp %11 : vector<16x1xf32>
    %13 = vector.broadcast %10 : vector<16x1xf32> to vector<16x128xf32>
    %14 = arith.subf %5, %13 : vector<16x128xf32>
    %15 = math.exp %14 : vector<16x128xf32>
    %c0_9 = arith.constant 0 : index
    %c0_10 = arith.constant 0 : index
    %16 = vector.load %arg8[%c0_9, %c0_10] : memref<16x1xf32, #tpu.memory_space<vmem>>, vector<16x1xf32>
    %17 = arith.mulf %12, %16 : vector<16x1xf32>
    %cst_11 = arith.constant dense<0.000000e+00> : vector<16xf32>
    %18 = vector.multi_reduction <add>, %15, %cst_11 [1] : vector<16x128xf32> to vector<16xf32>
    %19 = vector.shape_cast %18 : vector<16xf32> to vector<16x1xf32>
    %20 = arith.addf %17, %19 : vector<16x1xf32>
    %c0_12 = arith.constant 0 : index
    %c0_13 = arith.constant 0 : index
    %21 = vector.load %arg8[%c0_12, %c0_13] : memref<16x1xf32, #tpu.memory_space<vmem>>, vector<16x1xf32>
    tpu.vector_store %arg8[%c0_12, %c0_13], %20 {strides = array<i32>} : memref<16x1xf32, #tpu.memory_space<vmem>>, vector<16x1xf32>,
    %c0_14 = arith.constant 0 : index
    %c0_15 = arith.constant 0 : index
    %22 = vector.load %arg7[%c0_14, %c0_15] : memref<16x1xf32, #tpu.memory_space<vmem>>, vector<16x1xf32>
    tpu.vector_store %arg7[%c0_14, %c0_15], %10 {strides = array<i32>} : memref<16x1xf32, #tpu.memory_space<vmem>>, vector<16x1xf32>,
    %c128_i32 = arith.constant 128 : i32
    %23 = arith.muli %arg1, %c128_i32 : i32
    %24 = vector.broadcast %23 : i32 to vector<16x1xi32>
    %25 = arith.subi %6, %24 : vector<16x1xi32>
    %26 = tpu.iota {dimensions = array<i32: 1>} : vector<1x128xi32>
    %27 = vector.broadcast %26 : vector<1x128xi32> to vector<16x128xi32>
    %28 = vector.broadcast %25 : vector<16x1xi32> to vector<16x128xi32>
    %29 = arith.cmpi eq, %27, %28 : vector<16x128xi32>
    %30 = arith.extui %29 : vector<16x128xi1> to vector<16x128xi32>
    %31 = arith.sitofp %30 : vector<16x128xi32> to vector<16x128xf32>
    %c0_16 = arith.constant 0 : index
    %c0_17 = arith.constant 0 : index
    %32 = vector.load %arg9[%c0_16, %c0_17] : memref<16x1xf32, #tpu.memory_space<vmem>>, vector<16x1xf32>
    %33 = arith.mulf %5, %31 : vector<16x128xf32>
    %cst_18 = arith.constant dense<0.000000e+00> : vector<16xf32>
    %34 = vector.multi_reduction <add>, %33, %cst_18 [1] : vector<16x128xf32> to vector<16xf32>
    %35 = vector.shape_cast %34 : vector<16xf32> to vector<16x1xf32>
    %36 = arith.addf %32, %35 : vector<16x1xf32>
    %c0_19 = arith.constant 0 : index
    %c0_20 = arith.constant 0 : index
    %37 = vector.load %arg9[%c0_19, %c0_20] : memref<16x1xf32, #tpu.memory_space<vmem>>, vector<16x1xf32>
    tpu.vector_store %arg9[%c0_19, %c0_20], %36 {strides = array<i32>} : memref<16x1xf32, #tpu.memory_space<vmem>>, vector<16x1xf32>,
    %c0_i32_21 = arith.constant 0 : i32
    %38 = arith.cmpi eq, %arg1, %c0_i32_21 : i32
    %39 = arith.extui %38 : i1 to i32
    %c0_i32_22 = arith.constant 0 : i32
    %40 = arith.cmpi ne, %39, %c0_i32_22 : i32
    scf.if %40 {
      %c0_23 = arith.constant 0 : index
      %c0_24 = arith.constant 0 : index
      %41 = vector.load %arg7[%c0_23, %c0_24] : memref<16x1xf32, #tpu.memory_space<vmem>>, vector<16x1xf32>
      %c0_25 = arith.constant 0 : index
      %c0_26 = arith.constant 0 : index
      %42 = vector.load %arg8[%c0_25, %c0_26] : memref<16x1xf32, #tpu.memory_space<vmem>>, vector<16x1xf32>
      %43 = math.log %42 : vector<16x1xf32>
      %44 = arith.addf %41, %43 : vector<16x1xf32>
      %c0_27 = arith.constant 0 : index
      %c0_28 = arith.constant 0 : index
      %45 = vector.load %arg9[%c0_27, %c0_28] : memref<16x1xf32, #tpu.memory_space<vmem>>, vector<16x1xf32>
      %46 = arith.subf %44, %45 : vector<16x1xf32>
      %c0_i32_29 = arith.constant 0 : i32
      %47 = vector.broadcast %c0_i32_29 : i32 to vector<16x1xi32>
      %48 = arith.cmpi ne, %6, %47 : vector<16x1xi32>
      %cst_30 = arith.constant 0.000000e+00 : f32
      %49 = vector.broadcast %cst_30 : f32 to vector<16x1xf32>
      %50 = arith.select %48, %46, %49 : vector<16x1xi1>, vector<16x1xf32>
      %51 = vector.shape_cast %50 : vector<16x1xf32> to vector<1x16x1xf32>
      %cst_31 = arith.constant dense<0.000000e+00> : vector<1xf32>
      %52 = vector.multi_reduction <add>, %51, %cst_31 [1, 2] : vector<1x16x1xf32> to vector<1xf32>
      %53 = vector.shape_cast %52 : vector<1xf32> to vector<1x1x1xf32>
      %54 = vector.extract %53[0, 0, 0] : f32 from vector<1x1x1xf32>
      %55 = arith.extui %48 : vector<16x1xi1> to vector<16x1xi32>
      %56 = arith.sitofp %55 : vector<16x1xi32> to vector<16x1xf32>
      %57 = vector.shape_cast %56 : vector<16x1xf32> to vector<1x16x1xf32>
      %cst_32 = arith.constant dense<0.000000e+00> : vector<1xf32>
      %58 = vector.multi_reduction <add>, %57, %cst_32 [1, 2] : vector<1x16x1xf32> to vector<1xf32>
      %59 = vector.shape_cast %58 : vector<1xf32> to vector<1x1x1xf32>
      %60 = vector.extract %59[0, 0, 0] : f32 from vector<1x1x1xf32>
      %61 = vector.broadcast %54 : f32 to vector<1x1x128xf32>
      %c0_33 = arith.constant 0 : index
      %c0_34 = arith.constant 0 : index
      %c0_35 = arith.constant 0 : index
      %62 = vector.load %arg5[%c0_33, %c0_34, %c0_35] : memref<1x1x128xf32, #tpu.memory_space<vmem>>, vector<1x1x128xf32>
      tpu.vector_store %arg5[%c0_33, %c0_34, %c0_35], %61 {strides = array<i32>} : memref<1x1x128xf32, #tpu.memory_space<vmem>>, vector<1x1x128xf32>,
      %63 = vector.broadcast %60 : f32 to vector<1x1x128xf32>
      %c0_36 = arith.constant 0 : index
      %c0_37 = arith.constant 0 : index
      %c0_38 = arith.constant 0 : index
      %64 = vector.load %arg6[%c0_36, %c0_37, %c0_38] : memref<1x1x128xf32, #tpu.memory_space<vmem>>, vector<1x1x128xf32>
      tpu.vector_store %arg6[%c0_36, %c0_37, %c0_38], %63 {strides = array<i32>} : memref<1x1x128xf32, #tpu.memory_space<vmem>>, vector<1x1x128xf32>,
    } else {
    }
    return
  }
  func.func @transform_0(%arg0: i32, %arg1: i32) -> (i32, i32) {
    %c0_i32 = arith.constant 0 : i32
    %c0_i32_0 = arith.constant 0 : i32
    return %arg0, %c0_i32 : i32, i32
  }
  func.func @transform_1(%arg0: i32, %arg1: i32) -> (i32, i32) {
    %c0_i32 = arith.constant 0 : i32
    %c0_i32_0 = arith.constant 0 : i32
    return %arg1, %c0_i32 : i32, i32
  }
  func.func @transform_2(%arg0: i32, %arg1: i32) -> (i32, i32) {
    %c0_i32 = arith.constant 0 : i32
    %c0_i32_0 = arith.constant 0 : i32
    return %arg0, %c0_i32 : i32, i32
  }
  func.func @transform_3(%arg0: i32, %arg1: i32) -> (i32, i32, i32) {
    %c0_i32 = arith.constant 0 : i32
    %c0_i32_0 = arith.constant 0 : i32
    %c0_i32_1 = arith.constant 0 : i32
    return %arg0, %c0_i32, %c0_i32_0 : i32, i32, i32
  }
  func.func @transform_4(%arg0: i32, %arg1: i32) -> (i32, i32, i32) {
    %c0_i32 = arith.constant 0 : i32
    %c0_i32_0 = arith.constant 0 : i32
    %c0_i32_1 = arith.constant 0 : i32
    return %arg0, %c0_i32, %c0_i32_0 : i32, i32, i32
  }
}

</mosaic_0001>

<llo_original>
// kernel: tpu_custom_call.1
$region0: #{tpu_custom_call.1}
  #allocation0 [shape = 'u32[]', space=smem, size = 0x4, offset = 0x4, fixed_abs, tag = 'smem constant byte address 0x4 - core index']
  #allocation1 [shape = 'u32[144,128]{1,0:T(1,128)}', space=vmem, size = 0x12000, scoped, tag = 'internal scratch']
  #allocation2 [shape = 'f32[16,1]{1,0:T(8,128)}', space=vmem, size = 0x2000, scoped, tag = 'scratch operand']
  #allocation3 [shape = 'f32[16,1]{1,0:T(8,128)}', space=vmem, size = 0x2000, scoped, tag = 'scratch operand']
  #allocation4 [shape = 'f32[16,1]{1,0:T(8,128)}', space=vmem, size = 0x2000, scoped, tag = 'scratch operand']
  %s0 = inlined_call_operand.vmem [shape: bf16[16,128], index: 0, kind: input, shape index: {}]
  %s1 = inlined_call_operand.hbm [shape: bf16[128,128], index: 1, kind: input, shape index: {}]
  %s2 = inlined_call_operand.vmem [shape: s32[16,1], index: 2, kind: input, shape index: {}]
  %s3 = inlined_call_operand.hbm [shape: f32[1,1,128], index: 3, kind: output, shape index: {0}]
  %s4 = inlined_call_operand.hbm [shape: f32[1,1,128], index: 4, kind: output, shape index: {1}]
  %5 = xla_tuple %s3, %s4
  %s6 = sld [smem:[#allocation0]]
  $region42: #{tpu_custom_call.1} parent=0
    _
  %s8 = ssub.s32 1, %s6
  %s9 = scalar_select 0, %s8, %s6
  $region1: #{tpu_custom_call.1} parent=0
    #allocation5 [shape = 'u8[32768]{0}', space=vmem, size = 0x8000, scoped, tag = 'input window, operand 1, single buffered']
    #allocation6 [shape = 's32[1]{0}', space=sflag, size = 0x4, scoped, tag = 'scoped memory for tpu_custom_call.1']
    #allocation7 [shape = 's32[1]{0}', space=sflag, size = 0x4, scoped, tag = 'scoped memory for tpu_custom_call.1']
    #allocation8 [shape = 'u8[512]{0}', space=vmem, size = 0x400, scoped, tag = 'output window, operand 0, single buffered']
    #allocation9 [shape = 'u8[512]{0}', space=vmem, size = 0x400, scoped, tag = 'output window, operand 1, single buffered']
    #allocation10 [shape = 's32[1]{0}', space=sflag, size = 0x4, scoped, tag = 'scoped memory for tpu_custom_call.1']
    %10 = vsyncpa [#allocation6], 0
    %11 = vsyncpa [#allocation7], 0
    %12 = vsyncpa [#allocation10], 0
    // Predicated region
    $region2: #{tpu_custom_call.1} parent=1 // pred_check
      _
    $region3: #{tpu_custom_call.1} parent=1 // pred_check_branch
      %14 = sbr.rel (0) target = $region5
    $region4: #{tpu_custom_call.1} parent=1 // pred_region
      _
    $region5: #{tpu_custom_call.1} parent=1 // pred_fallthru
      _
    // Predicated region
    $region6: #{tpu_custom_call.1} parent=1 // pred_check
      _
    $region7: #{tpu_custom_call.1} parent=1 // pred_check_branch
      %16 = sbr.rel (0) target = $region9
    $region8: #{tpu_custom_call.1} parent=1 // pred_region
      %s18 = ssub.s32 1024, 1024
      %19 = vsyncadd [#allocation6], %s18
      %s20 = sshll.u32 [#allocation5], 4
      %s21 = int_to_ptr.vmem [resolvable:$true] %s20
      %26 = dma.hbm_to_vmem [thread:$0]  %s1, 1024, %s21, [#allocation6], 64, 64, 4
    $region9: #{tpu_custom_call.1} parent=1 // pred_fallthru
      _
    // Predicated region
    $region10: #{tpu_custom_call.1} parent=1 // pred_check
      _
    $region11: #{tpu_custom_call.1} parent=1 // pred_check_branch
      %28 = sbr.rel (0) target = $region13
    $region12: #{tpu_custom_call.1} parent=1 // pred_region
      _
    $region13: #{tpu_custom_call.1} parent=1 // pred_fallthru
      _
    // Predicated region
    $region14: #{tpu_custom_call.1} parent=1 // pred_check
      _
    $region15: #{tpu_custom_call.1} parent=1 // pred_check_branch
      %30 = sbr.rel (0) target = $region17
    $region16: #{tpu_custom_call.1} parent=1 // pred_region
      %31 = dma.done [#allocation6], 1024
    $region17: #{tpu_custom_call.1} parent=1 // pred_fallthru
      _
    %p33 = scmp.eq.s32.totalorder 0, 0
    // Predicated region
    $region18: #{tpu_custom_call.1} parent=1 // pred_check
      %p34 = pneg %p33
    $region19: #{tpu_custom_call.1} parent=1 // pred_check_branch
      %36 = sbr.rel (%p34) target = $region21
    $region20: #{tpu_custom_call.1} parent=1 // pred_region
      %vm37 = vcmask 7168
      %38 = vst.msk [vmem:[#allocation2] sm:$0xff] %vm37, -inf
      %39 = vst.msk [vmem:[#allocation2 + $0x8] sm:$0xff] %vm37, -inf
      %40 = vst.msk [vmem:[#allocation3] sm:$0xff] %vm37, 0.0
      %41 = vst.msk [vmem:[#allocation3 + $0x8] sm:$0xff] %vm37, 0.0
      %42 = vst.msk [vmem:[#allocation4] sm:$0xff] %vm37, 0.0
      %43 = vst.msk [vmem:[#allocation4 + $0x8] sm:$0xff] %vm37, 0.0
    $region21: #{tpu_custom_call.1} parent=1 // pred_fallthru
      _
    %v44 = vld [vmem:[%s0] sm:$0xf]
    %v45 = vld [vmem:[%s0 + $0x4] sm:$0xf]
    %v46 = vld [vmem:[#allocation5] sm:$0xf]
    %v47 = vld [vmem:[#allocation5 + $0x4] sm:$0xf]
    %v48 = vld [vmem:[#allocation5 + $0x8] sm:$0xf]
    %v49 = vld [vmem:[#allocation5 + $0xc] sm:$0xf]
    %v50 = vld [vmem:[#allocation5 + $0x10] sm:$0xf]
    %v51 = vld [vmem:[#allocation5 + $0x14] sm:$0xf]
    %v52 = vld [vmem:[#allocation5 + $0x18] sm:$0xf]
    %v53 = vld [vmem:[#allocation5 + $0x1c] sm:$0xf]
    %v54 = vld [vmem:[#allocation5 + $0x20] sm:$0xf]
    %v55 = vld [vmem:[#allocation5 + $0x24] sm:$0xf]
    %v56 = vld [vmem:[#allocation5 + $0x28] sm:$0xf]
    %v57 = vld [vmem:[#allocation5 + $0x2c] sm:$0xf]
    %v58 = vld [vmem:[#allocation5 + $0x30] sm:$0xf]
    %v59 = vld [vmem:[#allocation5 + $0x34] sm:$0xf]
    %v60 = vld [vmem:[#allocation5 + $0x38] sm:$0xf]
    %v61 = vld [vmem:[#allocation5 + $0x3c] sm:$0xf]
    %v64 = vunpack.c.l.b16 %v44
    %v65 = vunpack.c.l.b16 %v45
    %v66 = vpack.c.b16 %v65, %v64
    %v84 = vunpack.c.l.b16 %v46
    %v85 = vunpack.c.l.b16 %v47
    %v86 = vunpack.c.l.b16 %v48
    %v87 = vunpack.c.l.b16 %v49
    %v88 = vunpack.c.l.b16 %v50
    %v89 = vunpack.c.l.b16 %v51
    %v90 = vunpack.c.l.b16 %v52
    %v91 = vunpack.c.l.b16 %v53
    %v92 = vunpack.c.l.b16 %v54
    %v93 = vunpack.c.l.b16 %v55
    %v94 = vunpack.c.l.b16 %v56
    %v95 = vunpack.c.l.b16 %v57
    %v96 = vunpack.c.l.b16 %v58
    %v97 = vunpack.c.l.b16 %v59
    %v98 = vunpack.c.l.b16 %v60
    %v99 = vunpack.c.l.b16 %v61
    %v100 = vpack.c.b16 %v85, %v84
    %v101 = vpack.c.b16 %v87, %v86
    %v102 = vpack.c.b16 %v89, %v88
    %v103 = vpack.c.b16 %v91, %v90
    %v104 = vpack.c.b16 %v93, %v92
    %v105 = vpack.c.b16 %v95, %v94
    %v106 = vpack.c.b16 %v97, %v96
    %v107 = vpack.c.b16 %v99, %v98
    %116 = vmatprep.subr.bf16.mxu0 0
    %117 = vmatpush1.bf16.xpose.msra.mxu0 %v100
    %118 = vmatprep.subr.bf16.mxu0 0
    %119 = vmatpush1.bf16.xpose.msra.mxu0 %v101
    %120 = vmatprep.subr.bf16.mxu0 0
    %121 = vmatpush1.bf16.xpose.msra.mxu0 %v102
    %122 = vmatprep.subr.bf16.mxu0 0
    %123 = vmatpush1.bf16.xpose.msra.mxu0 %v103
    %124 = vmatprep.subr.bf16.mxu0 0
    %125 = vmatpush1.bf16.xpose.msra.mxu0 %v104
    %126 = vmatprep.subr.bf16.mxu0 0
    %127 = vmatpush1.bf16.xpose.msra.mxu0 %v105
    %128 = vmatprep.subr.bf16.mxu0 0
    %129 = vmatpush1.bf16.xpose.msra.mxu0 %v106
    %130 = vmatprep.subr.bf16.mxu0 0
    %131 = vmatpush1.bf16.xpose.msra.mxu0 %v107
    %132 = vmatprep.subr.bf16.mxu0 0
    %133 = vmatpush1.bf16.xpose.msra.mxu0 0
    %134 = vmatprep.subr.bf16.mxu0 0
    %135 = vmatpush1.bf16.xpose.msra.mxu0 0
    %136 = vmatprep.subr.bf16.mxu0 0
    %137 = vmatpush1.bf16.xpose.msra.mxu0 0
    %138 = vmatprep.subr.bf16.mxu0 0
    %139 = vmatpush1.bf16.xpose.msra.mxu0 0
    %140 = vmatprep.subr.bf16.mxu0 0
    %141 = vmatpush1.bf16.xpose.msra.mxu0 0
    %142 = vmatprep.subr.bf16.mxu0 0
    %143 = vmatpush1.bf16.xpose.msra.mxu0 0
    %144 = vmatprep.subr.bf16.mxu0 0
    %145 = vmatpush1.bf16.xpose.msra.mxu0 0
    %146 = vmatprep.subr.bf16.mxu0 0
    %147 = vmatpush1.bf16.xpose.msra.mxu0 0
    %148 = vmatprep.mubr.bf16.mxu0 0
    %149 = vmatmul.mubr.bf16.gmra.mrb[0].mxu0 %v66
    %v150 = vpop.f32.mrb[0].mxu0
    %v151 = vadd.f32 0.0, %v150
    %v152 = vpop.f32.mrb[0].mxu0
    %v153 = vpop.f32.mrb[0].mxu0
    %v154 = vadd.f32 0.0, %v153
    %v155 = vpop.f32.mrb[0].mxu0
    %156 = vdwg.mxu0
    %v157 = vld [vmem:[%s2] sm:$0xff]
    %v158 = vld [vmem:[%s2 + $0x8] sm:$0xff]
    %v159 = vld [vmem:[#allocation2] sm:$0xff]
    %v160 = vld [vmem:[#allocation2 + $0x8] sm:$0xff]
    %161 = vmax.xlane.f32.xlu0 %v151
    %v162 = vpop.xlane.xlu0 %161
    %163 = vmax.xlane.f32.xlu0 %v154
    %v164 = vpop.xlane.xlu0 %163
    %v165 = vmax.f32 %v159, %v162
    %v166 = vmax.f32 %v160, %v164
    %v167 = vsub.f32 %v159, %v165
    %v168 = vsub.f32 %v160, %v166
    %v169 = vmul.f32 %v167, 1.442695
    %v170 = vpow.pop %v169
    %v171 = vmul.f32 %v168, 1.442695
    %v172 = vpow.pop %v171
    %174 = vset.pattern.permute.xlu0 0
    %175 = vperm.xlu0 %174, %v165
    %v176 = vpop.permute.xlu0 %175
    %179 = vset.pattern.permute.xlu0 0
    %180 = vperm.xlu0 %179, %v166
    %v181 = vpop.permute.xlu0 %180
    %v183 = vsub.f32 %v151, %v176
    %v184 = vsub.f32 %v154, %v181
    %v185 = vmul.f32 %v183, 1.442695
    %v186 = vpow.pop %v185
    %v187 = vmul.f32 %v184, 1.442695
    %v188 = vpow.pop %v187
    %v189 = vld [vmem:[#allocation3] sm:$0xff]
    %v190 = vld [vmem:[#allocation3 + $0x8] sm:$0xff]
    %v191 = vmul.f32 %v170, %v189
    %v192 = vmul.f32 %v172, %v190
    %193 = vadd.xlane.f32.xlu0 %v186
    %v194 = vpop.xlane.xlu0 %193
    %195 = vadd.xlane.f32.xlu0 %v188
    %v196 = vpop.xlane.xlu0 %195
    %v197 = vadd.f32 %v191, %v194
    %v198 = vadd.f32 %v192, %v196
    %vm199 = vcmask 7168
    %200 = vst.msk [vmem:[#allocation3] sm:$0xff] %vm199, %v197
    %201 = vst.msk [vmem:[#allocation3 + $0x8] sm:$0xff] %vm199, %v198
    %202 = vst.msk [vmem:[#allocation2] sm:$0xff] %vm199, %v165
    %203 = vst.msk [vmem:[#allocation2 + $0x8] sm:$0xff] %vm199, %v166
    %s204 = smul.u32 0, 128
    %v205 = vstv %s204
    %v206 = vsub.s32 %v157, %v205
    %v207 = vsub.s32 %v158, %v205
    %v208 = vlaneseq
    %v209 = vand.u32 %v208, 127
    %210 = vset.pattern.permute.xlu0 0
    %211 = vperm.xlu0 %210, %v206
    %v212 = vpop.permute.xlu0 %211
    %213 = vset.pattern.permute.xlu0 0
    %214 = vperm.xlu0 %213, %v207
    %v215 = vpop.permute.xlu0 %214
    %vm216 = vcmp.eq.s32.totalorder %v209, %v212
    %vm217 = vcmp.eq.s32.totalorder %v209, %v215
    %v218 = vsel %vm216, 1, 0
    %v219 = vsel %vm217, 1, 0
    %v220 = vcvt.s32.f32 %v218
    %v221 = vcvt.s32.f32 %v219
    %v222 = vld [vmem:[#allocation4] sm:$0xff]
    %v223 = vld [vmem:[#allocation4 + $0x8] sm:$0xff]
    %v224 = vmul.f32 %v151, %v220
    %v225 = vmul.f32 %v154, %v221
    %226 = vadd.xlane.f32.xlu0 %v224
    %v227 = vpop.xlane.xlu0 %226
    %228 = vadd.xlane.f32.xlu0 %v225
    %v229 = vpop.xlane.xlu0 %228
    %v230 = vadd.f32 %v222, %v227
    %v231 = vadd.f32 %v223, %v229
    %232 = vst.msk [vmem:[#allocation4] sm:$0xff] %vm199, %v230
    %233 = vst.msk [vmem:[#allocation4 + $0x8] sm:$0xff] %vm199, %v231
    // Predicated region
    $region22: #{tpu_custom_call.1} parent=1 // pred_check
      %p234 = pneg %p33
    $region23: #{tpu_custom_call.1} parent=1 // pred_check_branch
      %236 = sbr.rel (%p234) target = $region25
    $region24: #{tpu_custom_call.1} parent=1 // pred_region
      %v237 = vld [vmem:[#allocation2] sm:$0xff]
      %v238 = vld [vmem:[#allocation2 + $0x8] sm:$0xff]
      %v239 = vld [vmem:[#allocation3] sm:$0xff]
      %v240 = vld [vmem:[#allocation3 + $0x8] sm:$0xff]
      %v241 = vlog2.pop %v239
      %v242 = vmul.f32 %v241, 0.6931472
      %v243 = vlog2.pop %v240
      %v244 = vmul.f32 %v243, 0.6931472
      %v245 = vadd.f32 %v237, %v242
      %v246 = vadd.f32 %v238, %v244
      %v247 = vld [vmem:[#allocation4] sm:$0xff]
      %v248 = vld [vmem:[#allocation4 + $0x8] sm:$0xff]
      %v249 = vsub.f32 %v245, %v247
      %v250 = vsub.f32 %v246, %v248
      %vm251 = vcmp.ne.s32.totalorder %v157, 0
      %vm252 = vcmp.ne.s32.totalorder %v158, 0
      %v253 = vsel %vm251, %v249, 0.0
      %v254 = vsel %vm252, %v250, 0.0
      %v255 = vsel %vm199, %v253, 0.0
      %v256 = vsel %vm199, %v254, 0.0
      %v257 = vadd.f32 %v255, %v256
      %258 = vadd.xlane.f32.xlu0 %v257
      %v259 = vpop.xlane.xlu0 %258
      %v260 = vrot.slane %v259, 4
      %v261 = vadd.f32 %v259, %v260
      %v262 = vrot.slane %v261, 2
      %v263 = vadd.f32 %v261, %v262
      %v264 = vrot.slane %v263, 1
      %v265 = vadd.f32 %v263, %v264
      %s266 = vtos %v265
      %v267 = vsel %vm251, 1, 0
      %v268 = vsel %vm252, 1, 0
      %v269 = vcvt.s32.f32 %v267
      %v270 = vcvt.s32.f32 %v268
      %v271 = vsel %vm199, %v269, 0.0
      %v272 = vsel %vm199, %v270, 0.0
      %v273 = vadd.f32 %v271, %v272
      %274 = vadd.xlane.f32.xlu0 %v273
      %v275 = vpop.xlane.xlu0 %274
      %v276 = vrot.slane %v275, 4
      %v277 = vadd.f32 %v275, %v276
      %v278 = vrot.slane %v277, 2
      %v279 = vadd.f32 %v277, %v278
      %v280 = vrot.slane %v279, 1
      %v281 = vadd.f32 %v279, %v280
      %s282 = vtos %v281
      %v283 = vstv %s266
      %284 = vst [vmem:[#allocation8] sm:$0x1] %v283
      %v285 = vstv %s282
      %286 = vst [vmem:[#allocation9] sm:$0x1] %v285
    $region25: #{tpu_custom_call.1} parent=1 // pred_fallthru
      _
    // Predicated region
    $region26: #{tpu_custom_call.1} parent=1 // pred_check
      _
    $region27: #{tpu_custom_call.1} parent=1 // pred_check_branch
      %288 = sbr.rel (0) target = $region29
    $region28: #{tpu_custom_call.1} parent=1 // pred_region
      %s290 = ssub.s32 16, 16
      %291 = vsyncadd [#allocation7], %s290
      %s293 = sshll.u32 [#allocation8], 4
      %s294 = int_to_ptr.vmem [resolvable:$true] %s293
      %296 = dma.vmem_to_hbm [thread:$0]  %s294, 16, %s3, [#allocation7]
    $region29: #{tpu_custom_call.1} parent=1 // pred_fallthru
      _
    // Predicated region
    $region30: #{tpu_custom_call.1} parent=1 // pred_check
      _
    $region31: #{tpu_custom_call.1} parent=1 // pred_check_branch
      %298 = sbr.rel (0) target = $region33
    $region32: #{tpu_custom_call.1} parent=1 // pred_region
      %s300 = ssub.s32 16, 16
      %301 = vsyncadd [#allocation10], %s300
      %s303 = sshll.u32 [#allocation9], 4
      %s304 = int_to_ptr.vmem [resolvable:$true] %s303
      %306 = dma.vmem_to_hbm [thread:$0]  %s304, 16, %s4, [#allocation10]
    $region33: #{tpu_custom_call.1} parent=1 // pred_fallthru
      _
    // Predicated region
    $region34: #{tpu_custom_call.1} parent=1 // pred_check
      _
    $region35: #{tpu_custom_call.1} parent=1 // pred_check_branch
      %308 = sbr.rel (0) target = $region37
    $region36: #{tpu_custom_call.1} parent=1 // pred_region
      %309 = dma.done [#allocation7], 16
    $region37: #{tpu_custom_call.1} parent=1 // pred_fallthru
      _
    // Predicated region
    $region38: #{tpu_custom_call.1} parent=1 // pred_check
      _
    $region39: #{tpu_custom_call.1} parent=1 // pred_check_branch
      %311 = sbr.rel (0) target = $region41
    $region40: #{tpu_custom_call.1} parent=1 // pred_region
      %312 = dma.done [#allocation10], 16
    $region41: #{tpu_custom_call.1} parent=1 // pred_fallthru
      _
    %313 = vsyncpa [#allocation6], 1
    %314 = vsyncpa [#allocation7], 1
    %315 = vsyncpa [#allocation10], 1

</llo_original>
